<compile_context>
chip_gen: v5e
topology: v5e:2x2
jax: 0.10.0
libtpu: 0.0.40
codegen_flags: <defaults>
</compile_context>

<pallas_src>
import functools
from typing import NamedTuple

import jax
import jax.numpy as jnp
from jax.experimental import pallas as pl
from jax.experimental.pallas import tpu as pltpu

# Hyperparameters normally read from parameters.json — fixed deterministically here.
# TODO(synk): parameters.json file read has no in-kernel equivalent; values hard-coded.
HIDDEN_DIM = 32   # agent_parameters.hidden_dim
NUM_LAYERS = 2    # agent_parameters.num_layers

LANE = 128        # TPU lane width: hidden/output feature dims padded to this
MAX_TB = 4096     # max batch-tile rows (big tiles amortize per-step overhead,
                  # still only ~5 MiB of per-step VMEM in the worst case)


def _round_up(x, m):
    return ((x + m - 1) // m) * m


class AgentParams(NamedTuple):
    """Padded, pre-cast parameters (built once; weights in the compute dtype)."""
    w_in: jax.Array    # (num_inputs, hpad)   compute dtype
    b_in: jax.Array    # (1, hpad)            f32 (added post f32-accumulation)
    w_mid: jax.Array   # (hpad, hpad)         compute dtype
    b_mid: jax.Array   # (1, hpad)            f32
    w_out: jax.Array   # (hpad, opad)         compute dtype
    b_out: jax.Array   # (1, opad)            f32
    num_outputs: int   # real (unpadded) output width


def _agent_kernel(x_ref, w_in_ref, b_in_ref, w_mid_ref, b_mid_ref,
                  w_out_ref, b_out_ref, o_ref, *, num_layers):
    # Weights arrive already in the compute dtype (pre-cast in the wrapper),
    # so the only per-tile cast is the small (tb, num_inputs) input tile.
    compute_dtype = w_in_ref.dtype
    x = x_ref[...].astype(compute_dtype)
    w_in = w_in_ref[...]
    b_in = b_in_ref[...]
    w_mid = w_mid_ref[...]
    b_mid = b_mid_ref[...]
    w_out = w_out_ref[...]
    b_out = b_out_ref[...]

    # h_relu = clamp(input_linear(x), min=0)   — f32 MXU accumulation
    h = jnp.dot(x, w_in, preferred_element_type=jnp.float32) + b_in
    h = jnp.maximum(h, 0.0)

    # for _ in range(num_layers): h_relu = clamp(middle_linear(h_relu), min=0)
    for _ in range(num_layers):  # static unroll (num_layers is a config constant)
        h = jnp.dot(h.astype(compute_dtype), w_mid,
                    preferred_element_type=jnp.float32) + b_mid
        h = jnp.maximum(h, 0.0)

    # q_pred = output_linear(h_relu) — lane-dense (128-wide) store in o_ref.dtype
    q = jnp.dot(h.astype(compute_dtype), w_out,
                preferred_element_type=jnp.float32) + b_out
    o_ref[...] = q.astype(o_ref.dtype)


def prepare_params(raw_params, *, use_bf16=True):
    """Pad feature dims to 128 lanes and pre-cast weights — done ONCE at init.

    Zero padding is exact: padded hidden lanes stay 0 through ReLU, zero weight
    rows contribute nothing, padded output lanes are sliced off in the forward.
    """
    w_in, b_in, w_mid, b_mid, w_out, b_out = raw_params
    num_inputs, hidden = w_in.shape
    num_outputs = w_out.shape[1]
    hpad = _round_up(hidden, LANE)
    opad = _round_up(num_outputs, LANE)

    wdt = jnp.bfloat16 if use_bf16 else jnp.float32
    f32 = jnp.float32
    w_in_p = jnp.zeros((num_inputs, hpad), f32).at[:, :hidden].set(w_in).astype(wdt)
    b_in_p = jnp.zeros((1, hpad), f32).at[:, :hidden].set(b_in)
    w_mid_p = jnp.zeros((hpad, hpad), f32).at[:hidden, :hidden].set(w_mid).astype(wdt)
    b_mid_p = jnp.zeros((1, hpad), f32).at[:, :hidden].set(b_mid)
    w_out_p = jnp.zeros((hpad, opad), f32).at[:hidden, :num_outputs].set(w_out).astype(wdt)
    b_out_p = jnp.zeros((1, opad), f32).at[:, :num_outputs].set(b_out)
    return AgentParams(w_in_p, b_in_p, w_mid_p, b_mid_p, w_out_p, b_out_p,
                       num_outputs)


def agent_forward(x, params: AgentParams, *, num_layers=NUM_LAYERS):
    batch, num_inputs = x.shape
    opad = params.w_out.shape[1]
    num_outputs = params.num_outputs
    # Output in the compute dtype -> bf16 writeback halves the padded HBM stream.
    out_dtype = jnp.bfloat16 if params.w_in.dtype == jnp.bfloat16 else jnp.float32

    # --- Batch tiling: aim for >= 2 grid steps (keeps both v7x TensorCores busy;
    #     a no-op on single-TC v5e/v6e), capped at MAX_TB rows per tile. ---
    b8 = _round_up(batch, 8)
    tb = min(MAX_TB, _round_up(pl.cdiv(b8, 2), 8))
    padded_batch = _round_up(batch, tb)
    x_p = x if padded_batch == batch else jnp.pad(
        x, ((0, padded_batch - batch), (0, 0)))

    kernel = functools.partial(_agent_kernel, num_layers=num_layers)

    # Weights/biases: constant index_map -> stay resident in VMEM, never re-DMA'd.
    resident = lambda a: pl.BlockSpec(a.shape, lambda i: (0, 0))

    q_pad = pl.pallas_call(
        kernel,
        out_shape=jax.ShapeDtypeStruct((padded_batch, opad), out_dtype),
        grid=(padded_batch // tb,),
        in_specs=[
            pl.BlockSpec((tb, num_inputs), lambda i: (i, 0)),
            resident(params.w_in), resident(params.b_in),
            resident(params.w_mid), resident(params.b_mid),
            resident(params.w_out), resident(params.b_out),
        ],
        out_specs=pl.BlockSpec((tb, opad), lambda i: (i, 0)),
        compiler_params=pltpu.CompilerParams(
            dimension_semantics=("parallel",)),   # megacore sharding on v7x
    )(x_p, params.w_in, params.b_in, params.w_mid, params.b_mid,
      params.w_out, params.b_out)

    return q_pad[:batch, :num_outputs]


def init_params(key, num_inputs, num_outputs, hidden_dim):
    # PyTorch Linear default init: U(-1/sqrt(fan_in), 1/sqrt(fan_in))
    ks = jax.random.split(key, 6)

    def lin(kw, kb, fan_in, fan_out):
        bound = 1.0 / jnp.sqrt(fan_in)
        w = jax.random.uniform(kw, (fan_in, fan_out), jnp.float32, -bound, bound)
        b = jax.random.uniform(kb, (1, fan_out), jnp.float32, -bound, bound)
        return w, b

    w_in, b_in = lin(ks[0], ks[1], num_inputs, hidden_dim)
    w_mid, b_mid = lin(ks[2], ks[3], hidden_dim, hidden_dim)
    w_out, b_out = lin(ks[4], ks[5], hidden_dim, num_outputs)
    return w_in, b_in, w_mid, b_mid, w_out, b_out


def _reference(x, raw_params, num_layers=NUM_LAYERS):
    w_in, b_in, w_mid, b_mid, w_out, b_out = raw_params
    h = jnp.maximum(x @ w_in + b_in, 0.0)
    for _ in range(num_layers):
        h = jnp.maximum(h @ w_mid + b_mid, 0.0)
    return h @ w_out + b_out


if __name__ == "__main__":
    key = jax.random.PRNGKey(0)
    k_x, k_p = jax.random.split(key)

    batch, num_inputs, num_outputs = 8, 16, 8
    x = jax.random.normal(k_x, (batch, num_inputs), jnp.float32)
    raw = init_params(k_p, num_inputs, num_outputs, HIDDEN_DIM)
    ref = _reference(x, raw)

    # Exact f32 MXU path (validation path)
    p_f32 = prepare_params(raw, use_bf16=False)
    q_f32 = agent_forward(x, p_f32)
    jax.block_until_ready(q_f32)
    assert q_f32.shape == (batch, num_outputs)
    assert jnp.allclose(q_f32, ref, atol=1e-5, rtol=1e-5)

    # Default bf16-operand / f32-accumulate path (pre-cast weights, bf16 writeback)
    p_bf16 = prepare_params(raw)  # use_bf16=True by default
    q_bf16 = agent_forward(x, p_bf16)
    jax.block_until_ready(q_bf16)
    assert q_bf16.shape == (batch, num_outputs)
    assert q_bf16.dtype == jnp.bfloat16
    assert jnp.allclose(q_bf16.astype(jnp.float32), ref, atol=1e-1, rtol=1e-1)

    # Larger, non-tile-multiple batch -> >= 2 grid steps (pipelined, megacore-shardable)
    big_batch = 1000
    xb = jax.random.normal(jax.random.PRNGKey(1), (big_batch, num_inputs), jnp.float32)
    refb = _reference(xb, raw)

    qb_f32 = agent_forward(xb, p_f32)
    jax.block_until_ready(qb_f32)
    assert qb_f32.shape == (big_batch, num_outputs)
    assert jnp.allclose(qb_f32, refb, atol=1e-5, rtol=1e-5)

    qb_bf16 = agent_forward(xb, p_bf16)
    jax.block_until_ready(qb_bf16)
    assert qb_bf16.shape == (big_batch, num_outputs)
    assert jnp.allclose(qb_bf16.astype(jnp.float32), refb, atol=1e-1, rtol=1e-1)

    print("KERNEL_OK")
</pallas_src>

<mosaic_0001>
module attributes {stable_mosaic.version = 11 : i64} {
  func.func @_agent_kernel(%arg0: i32, %arg1: memref<8x16xf32, #tpu.memory_space<vmem>>, %arg2: memref<16x128xf32, #tpu.memory_space<vmem>>, %arg3: memref<1x128xf32, #tpu.memory_space<vmem>>, %arg4: memref<128x128xf32, #tpu.memory_space<vmem>>, %arg5: memref<1x128xf32, #tpu.memory_space<vmem>>, %arg6: memref<128x128xf32, #tpu.memory_space<vmem>>, %arg7: memref<1x128xf32, #tpu.memory_space<vmem>>, %arg8: memref<8x128xf32, #tpu.memory_space<vmem>>) attributes {dimension_semantics = [#tpu.dimension_semantics<parallel>], iteration_bounds = array<i64: 1>, scalar_prefetch = 0 : i64, scratch_operands = 0 : i64, tpu.core_type = #tpu.core_type<tc>, window_params = [{transform_indices = @transform_0, window_bounds = array<i64: 8, 16>}, {pipeline_mode = #tpu.pipeline_mode<synchronous>, transform_indices = @transform_1, window_bounds = array<i64: 16, 128>}, {pipeline_mode = #tpu.pipeline_mode<synchronous>, transform_indices = @transform_2, window_bounds = array<i64: 1, 128>}, {pipeline_mode = #tpu.pipeline_mode<synchronous>, transform_indices = @transform_3, window_bounds = array<i64: 128, 128>}, {pipeline_mode = #tpu.pipeline_mode<synchronous>, transform_indices = @transform_4, window_bounds = array<i64: 1, 128>}, {pipeline_mode = #tpu.pipeline_mode<synchronous>, transform_indices = @transform_5, window_bounds = array<i64: 128, 128>}, {pipeline_mode = #tpu.pipeline_mode<synchronous>, transform_indices = @transform_6, window_bounds = array<i64: 1, 128>}, {transform_indices = @transform_7, window_bounds = array<i64: 8, 128>}]} {
    %c0 = arith.constant 0 : index
    %c0_0 = arith.constant 0 : index
    %0 = vector.load %arg1[%c0, %c0_0] : memref<8x16xf32, #tpu.memory_space<vmem>>, vector<8x16xf32>
    %c0_1 = arith.constant 0 : index
    %c0_2 = arith.constant 0 : index
    %1 = vector.load %arg2[%c0_1, %c0_2] : memref<16x128xf32, #tpu.memory_space<vmem>>, vector<16x128xf32>
    %c0_3 = arith.constant 0 : index
    %c0_4 = arith.constant 0 : index
    %2 = vector.load %arg3[%c0_3, %c0_4] : memref<1x128xf32, #tpu.memory_space<vmem>>, vector<1x128xf32>
    %c0_5 = arith.constant 0 : index
    %c0_6 = arith.constant 0 : index
    %3 = vector.load %arg4[%c0_5, %c0_6] : memref<128x128xf32, #tpu.memory_space<vmem>>, vector<128x128xf32>
    %c0_7 = arith.constant 0 : index
    %c0_8 = arith.constant 0 : index
    %4 = vector.load %arg5[%c0_7, %c0_8] : memref<1x128xf32, #tpu.memory_space<vmem>>, vector<1x128xf32>
    %c0_9 = arith.constant 0 : index
    %c0_10 = arith.constant 0 : index
    %5 = vector.load %arg6[%c0_9, %c0_10] : memref<128x128xf32, #tpu.memory_space<vmem>>, vector<128x128xf32>
    %c0_11 = arith.constant 0 : index
    %c0_12 = arith.constant 0 : index
    %6 = vector.load %arg7[%c0_11, %c0_12] : memref<1x128xf32, #tpu.memory_space<vmem>>, vector<1x128xf32>
    %cst = arith.constant dense<0.000000e+00> : vector<8x128xf32>
    %7 = tpu.matmul %0, %1, %cst {dimension_numbers = #tpu.dot_dimension_numbers<[1], [0], [0], [1], [0, 0, 1, 1], [], []>} : vector<8x16xf32>, vector<16x128xf32>, vector<8x128xf32> -> vector<8x128xf32>
    %8 = vector.broadcast %2 : vector<1x128xf32> to vector<8x128xf32>
    %9 = arith.addf %7, %8 : vector<8x128xf32>
    %cst_13 = arith.constant 0.000000e+00 : f32
    %10 = vector.broadcast %cst_13 : f32 to vector<8x128xf32>
    %11 = arith.maximumf %9, %10 : vector<8x128xf32>
    %cst_14 = arith.constant dense<0.000000e+00> : vector<8x128xf32>
    %12 = tpu.matmul %11, %3, %cst_14 {dimension_numbers = #tpu.dot_dimension_numbers<[1], [0], [0], [1], [0, 0, 1, 1], [], []>} : vector<8x128xf32>, vector<128x128xf32>, vector<8x128xf32> -> vector<8x128xf32>
    %13 = vector.broadcast %4 : vector<1x128xf32> to vector<8x128xf32>
    %14 = arith.addf %12, %13 : vector<8x128xf32>
    %cst_15 = arith.constant 0.000000e+00 : f32
    %15 = vector.broadcast %cst_15 : f32 to vector<8x128xf32>
    %16 = arith.maximumf %14, %15 : vector<8x128xf32>
    %cst_16 = arith.constant dense<0.000000e+00> : vector<8x128xf32>
    %17 = tpu.matmul %16, %3, %cst_16 {dimension_numbers = #tpu.dot_dimension_numbers<[1], [0], [0], [1], [0, 0, 1, 1], [], []>} : vector<8x128xf32>, vector<128x128xf32>, vector<8x128xf32> -> vector<8x128xf32>
    %18 = vector.broadcast %4 : vector<1x128xf32> to vector<8x128xf32>
    %19 = arith.addf %17, %18 : vector<8x128xf32>
    %cst_17 = arith.constant 0.000000e+00 : f32
    %20 = vector.broadcast %cst_17 : f32 to vector<8x128xf32>
    %21 = arith.maximumf %19, %20 : vector<8x128xf32>
    %cst_18 = arith.constant dense<0.000000e+00> : vector<8x128xf32>
    %22 = tpu.matmul %21, %5, %cst_18 {dimension_numbers = #tpu.dot_dimension_numbers<[1], [0], [0], [1], [0, 0, 1, 1], [], []>} : vector<8x128xf32>, vector<128x128xf32>, vector<8x128xf32> -> vector<8x128xf32>
    %23 = vector.broadcast %6 : vector<1x128xf32> to vector<8x128xf32>
    %24 = arith.addf %22, %23 : vector<8x128xf32>
    %c0_19 = arith.constant 0 : index
    %c0_20 = arith.constant 0 : index
    %25 = vector.load %arg8[%c0_19, %c0_20] : memref<8x128xf32, #tpu.memory_space<vmem>>, vector<8x128xf32>
    tpu.vector_store %arg8[%c0_19, %c0_20], %24 {strides = array<i32>} : memref<8x128xf32, #tpu.memory_space<vmem>>, vector<8x128xf32>,
    return
  }
  func.func @transform_0(%arg0: i32) -> (i32, i32) {
    %c0_i32 = arith.constant 0 : i32
    %c0_i32_0 = arith.constant 0 : i32
    return %arg0, %c0_i32 : i32, i32
  }
  func.func @transform_1(%arg0: i32) -> (i32, i32) {
    %c0_i32 = arith.constant 0 : i32
    %c0_i32_0 = arith.constant 0 : i32
    %c0_i32_1 = arith.constant 0 : i32
    return %c0_i32, %c0_i32_0 : i32, i32
  }
  func.func @transform_2(%arg0: i32) -> (i32, i32) {
    %c0_i32 = arith.constant 0 : i32
    %c0_i32_0 = arith.constant 0 : i32
    %c0_i32_1 = arith.constant 0 : i32
    return %c0_i32, %c0_i32_0 : i32, i32
  }
  func.func @transform_3(%arg0: i32) -> (i32, i32) {
    %c0_i32 = arith.constant 0 : i32
    %c0_i32_0 = arith.constant 0 : i32
    %c0_i32_1 = arith.constant 0 : i32
    return %c0_i32, %c0_i32_0 : i32, i32
  }
  func.func @transform_4(%arg0: i32) -> (i32, i32) {
    %c0_i32 = arith.constant 0 : i32
    %c0_i32_0 = arith.constant 0 : i32
    %c0_i32_1 = arith.constant 0 : i32
    return %c0_i32, %c0_i32_0 : i32, i32
  }
  func.func @transform_5(%arg0: i32) -> (i32, i32) {
    %c0_i32 = arith.constant 0 : i32
    %c0_i32_0 = arith.constant 0 : i32
    %c0_i32_1 = arith.constant 0 : i32
    return %c0_i32, %c0_i32_0 : i32, i32
  }
  func.func @transform_6(%arg0: i32) -> (i32, i32) {
    %c0_i32 = arith.constant 0 : i32
    %c0_i32_0 = arith.constant 0 : i32
    %c0_i32_1 = arith.constant 0 : i32
    return %c0_i32, %c0_i32_0 : i32, i32
  }
  func.func @transform_7(%arg0: i32) -> (i32, i32) {
    %c0_i32 = arith.constant 0 : i32
    %c0_i32_0 = arith.constant 0 : i32
    return %arg0, %c0_i32 : i32, i32
  }
}

</mosaic_0001>

<llo_original>
// kernel: tpu_custom_call.1
$region0: #{tpu_custom_call.1}
  #allocation0 [shape = 'u32[]', space=smem, size = 0x4, offset = 0x4, fixed_abs, tag = 'smem constant byte address 0x4 - core index']
  #allocation1 [shape = 'u32[72,128]{1,0:T(1,128)}', space=vmem, size = 0x9000, scoped, tag = 'internal scratch']
  %s0 = inlined_call_operand.hbm [shape: f32[8,16], index: 0, kind: input, shape index: {}]
  %s1 = inlined_call_operand.hbm [shape: f32[16,128], index: 1, kind: input, shape index: {}]
  %s2 = inlined_call_operand.vmem [shape: f32[1,128], index: 2, kind: input, shape index: {}]
  %s3 = inlined_call_operand.hbm [shape: f32[128,128], index: 3, kind: input, shape index: {}]
  %s4 = inlined_call_operand.vmem [shape: f32[1,128], index: 4, kind: input, shape index: {}]
  %s5 = inlined_call_operand.hbm [shape: f32[128,128], index: 5, kind: input, shape index: {}]
  %s6 = inlined_call_operand.vmem [shape: f32[1,128], index: 6, kind: input, shape index: {}]
  %s7 = inlined_call_operand.hbm [shape: f32[8,128], index: 7, kind: output, shape index: {}]
  %s8 = sld [smem:[#allocation0]]
  $region54: #{tpu_custom_call.1} parent=0
    _
  %s10 = ssub.s32 1, %s8
  %s11 = scalar_select 0, %s10, %s8
  $region1: #{tpu_custom_call.1} parent=0
    #allocation2 [shape = 'u8[4096]{0}', space=vmem, size = 0x1000, scoped, tag = 'input window, operand 0, single buffered']
    #allocation3 [shape = 's32[1]{0}', space=sflag, size = 0x4, scoped, tag = 'scoped memory for tpu_custom_call.1']
    #allocation4 [shape = 's32[1]{0}', space=sflag, size = 0x4, scoped, tag = 'scoped memory for tpu_custom_call.1']
    #allocation5 [shape = 'u8[8192]{0}', space=vmem, size = 0x2000, scoped, tag = 'input window, operand 1, single buffered']
    #allocation6 [shape = 's32[1]{0}', space=sflag, size = 0x4, scoped, tag = 'scoped memory for tpu_custom_call.1']
    #allocation7 [shape = 'u8[65536]{0}', space=vmem, size = 0x10000, scoped, tag = 'input window, operand 3, single buffered']
    #allocation8 [shape = 'u8[65536]{0}', space=vmem, size = 0x10000, scoped, tag = 'input window, operand 5, single buffered']
    #allocation9 [shape = 's32[1]{0}', space=sflag, size = 0x4, scoped, tag = 'scoped memory for tpu_custom_call.1']
    #allocation10 [shape = 'u8[4096]{0}', space=vmem, size = 0x1000, scoped, tag = 'output window, operand 0, single buffered']
    %12 = vsyncpa [#allocation3], 0
    %13 = vsyncpa [#allocation6], 0
    %14 = vsyncpa [#allocation9], 0
    %15 = vsyncpa [#allocation4], 0
    // Predicated region
    $region2: #{tpu_custom_call.1} parent=1 // pred_check
      _
    $region3: #{tpu_custom_call.1} parent=1 // pred_check_branch
      %17 = sbr.rel (0) target = $region5
    $region4: #{tpu_custom_call.1} parent=1 // pred_region
      %19 = vsyncadd [#allocation3], 0
      %s21 = sshll.u32 %s0, 4
      %s22 = int_to_ptr.hbm [resolvable:$true] %s21
      %s23 = sshll.u32 [#allocation2], 4
      %s24 = int_to_ptr.vmem [resolvable:$true] %s23
      %26 = dma.hbm_to_vmem [thread:$0]  %s22, 128, %s24, [#allocation3]
    $region5: #{tpu_custom_call.1} parent=1 // pred_fallthru
      _
    // Predicated region
    $region6: #{tpu_custom_call.1} parent=1 // pred_check
      _
    $region7: #{tpu_custom_call.1} parent=1 // pred_check_branch
      %28 = sbr.rel (0) target = $region9
    $region8: #{tpu_custom_call.1} parent=1 // pred_region
      %30 = vsyncadd [#allocation6], 0
      %s31 = sshll.u32 %s1, 4
      %s32 = int_to_ptr.hbm [resolvable:$true] %s31
      %s33 = sshll.u32 [#allocation5], 4
      %s34 = int_to_ptr.vmem [resolvable:$true] %s33
      %39 = dma.hbm_to_vmem [thread:$0]  %s32, 256, %s34, [#allocation6], 128, 128, 8
    $region9: #{tpu_custom_call.1} parent=1 // pred_fallthru
      _
    // Predicated region
    $region10: #{tpu_custom_call.1} parent=1 // pred_check
      _
    $region11: #{tpu_custom_call.1} parent=1 // pred_check_branch
      %41 = sbr.rel (0) target = $region13
    $region12: #{tpu_custom_call.1} parent=1 // pred_region
      _
    $region13: #{tpu_custom_call.1} parent=1 // pred_fallthru
      _
    // Predicated region
    $region14: #{tpu_custom_call.1} parent=1 // pred_check
      _
    $region15: #{tpu_custom_call.1} parent=1 // pred_check_branch
      %43 = sbr.rel (0) target = $region17
    $region16: #{tpu_custom_call.1} parent=1 // pred_region
      %45 = vsyncadd [#allocation6], 0
      %s46 = sshll.u32 %s3, 4
      %s47 = int_to_ptr.hbm [resolvable:$true] %s46
      %s48 = sshll.u32 [#allocation7], 4
      %s49 = int_to_ptr.vmem [resolvable:$true] %s48
      %54 = dma.hbm_to_vmem [thread:$0]  %s47, 2048, %s49, [#allocation6], 128, 128, 8
    $region17: #{tpu_custom_call.1} parent=1 // pred_fallthru
      _
    // Predicated region
    $region18: #{tpu_custom_call.1} parent=1 // pred_check
      _
    $region19: #{tpu_custom_call.1} parent=1 // pred_check_branch
      %56 = sbr.rel (0) target = $region21
    $region20: #{tpu_custom_call.1} parent=1 // pred_region
      _
    $region21: #{tpu_custom_call.1} parent=1 // pred_fallthru
      _
    // Predicated region
    $region22: #{tpu_custom_call.1} parent=1 // pred_check
      _
    $region23: #{tpu_custom_call.1} parent=1 // pred_check_branch
      %58 = sbr.rel (0) target = $region25
    $region24: #{tpu_custom_call.1} parent=1 // pred_region
      %60 = vsyncadd [#allocation9], 0
      %s61 = sshll.u32 %s5, 4
      %s62 = int_to_ptr.hbm [resolvable:$true] %s61
      %s63 = sshll.u32 [#allocation8], 4
      %s64 = int_to_ptr.vmem [resolvable:$true] %s63
      %69 = dma.hbm_to_vmem [thread:$0]  %s62, 2048, %s64, [#allocation9], 128, 128, 8
    $region25: #{tpu_custom_call.1} parent=1 // pred_fallthru
      _
    // Predicated region
    $region26: #{tpu_custom_call.1} parent=1 // pred_check
      _
    $region27: #{tpu_custom_call.1} parent=1 // pred_check_branch
      %71 = sbr.rel (0) target = $region29
    $region28: #{tpu_custom_call.1} parent=1 // pred_region
      _
    $region29: #{tpu_custom_call.1} parent=1 // pred_fallthru
      _
    // Predicated region
    $region30: #{tpu_custom_call.1} parent=1 // pred_check
      _
    $region31: #{tpu_custom_call.1} parent=1 // pred_check_branch
      %73 = sbr.rel (0) target = $region33
    $region32: #{tpu_custom_call.1} parent=1 // pred_region
      %75 = dma.done [#allocation3], 128
    $region33: #{tpu_custom_call.1} parent=1 // pred_fallthru
      _
    // Predicated region
    $region34: #{tpu_custom_call.1} parent=1 // pred_check
      _
    $region35: #{tpu_custom_call.1} parent=1 // pred_check_branch
      %77 = sbr.rel (0) target = $region37
    $region36: #{tpu_custom_call.1} parent=1 // pred_region
      %79 = dma.done [#allocation6], 256
    $region37: #{tpu_custom_call.1} parent=1 // pred_fallthru
      _
    // Predicated region
    $region38: #{tpu_custom_call.1} parent=1 // pred_check
      _
    $region39: #{tpu_custom_call.1} parent=1 // pred_check_branch
      %81 = sbr.rel (0) target = $region41
    $region40: #{tpu_custom_call.1} parent=1 // pred_region
      %83 = dma.done [#allocation6], 2048
    $region41: #{tpu_custom_call.1} parent=1 // pred_fallthru
      _
    // Predicated region
    $region42: #{tpu_custom_call.1} parent=1 // pred_check
      _
    $region43: #{tpu_custom_call.1} parent=1 // pred_check_branch
      %85 = sbr.rel (0) target = $region45
    $region44: #{tpu_custom_call.1} parent=1 // pred_region
      %87 = dma.done [#allocation9], 2048
    $region45: #{tpu_custom_call.1} parent=1 // pred_fallthru
      _
    %v88 = vld [vmem:[#allocation2] sm:$0xff]
    %v89 = vld [vmem:[#allocation5] sm:$0xff]
    %v90 = vld [vmem:[#allocation5 + $0x8] sm:$0xff]
    %v91 = vld [vmem:[%s2] sm:$0x1]
    %v92 = vld [vmem:[#allocation7] sm:$0xff]
    %v93 = vld [vmem:[#allocation7 + $0x8] sm:$0xff]
    %v94 = vld [vmem:[#allocation7 + $0x10] sm:$0xff]
    %v95 = vld [vmem:[#allocation7 + $0x18] sm:$0xff]
    %v96 = vld [vmem:[#allocation7 + $0x20] sm:$0xff]
    %v97 = vld [vmem:[#allocation7 + $0x28] sm:$0xff]
    %v98 = vld [vmem:[#allocation7 + $0x30] sm:$0xff]
    %v99 = vld [vmem:[#allocation7 + $0x38] sm:$0xff]
    %v100 = vld [vmem:[#allocation7 + $0x40] sm:$0xff]
    %v101 = vld [vmem:[#allocation7 + $0x48] sm:$0xff]
    %v102 = vld [vmem:[#allocation7 + $0x50] sm:$0xff]
    %v103 = vld [vmem:[#allocation7 + $0x58] sm:$0xff]
    %v104 = vld [vmem:[#allocation7 + $0x60] sm:$0xff]
    %v105 = vld [vmem:[#allocation7 + $0x68] sm:$0xff]
    %v106 = vld [vmem:[#allocation7 + $0x70] sm:$0xff]
    %v107 = vld [vmem:[#allocation7 + $0x78] sm:$0xff]
    %v108 = vld [vmem:[%s4] sm:$0x1]
    %v109 = vld [vmem:[#allocation8] sm:$0xff]
    %v110 = vld [vmem:[#allocation8 + $0x8] sm:$0xff]
    %v111 = vld [vmem:[#allocation8 + $0x10] sm:$0xff]
    %v112 = vld [vmem:[#allocation8 + $0x18] sm:$0xff]
    %v113 = vld [vmem:[#allocation8 + $0x20] sm:$0xff]
    %v114 = vld [vmem:[#allocation8 + $0x28] sm:$0xff]
    %v115 = vld [vmem:[#allocation8 + $0x30] sm:$0xff]
    %v116 = vld [vmem:[#allocation8 + $0x38] sm:$0xff]
    %v117 = vld [vmem:[#allocation8 + $0x40] sm:$0xff]
    %v118 = vld [vmem:[#allocation8 + $0x48] sm:$0xff]
    %v119 = vld [vmem:[#allocation8 + $0x50] sm:$0xff]
    %v120 = vld [vmem:[#allocation8 + $0x58] sm:$0xff]
    %v121 = vld [vmem:[#allocation8 + $0x60] sm:$0xff]
    %v122 = vld [vmem:[#allocation8 + $0x68] sm:$0xff]
    %v123 = vld [vmem:[#allocation8 + $0x70] sm:$0xff]
    %v124 = vld [vmem:[#allocation8 + $0x78] sm:$0xff]
    %v125 = vld [vmem:[%s6] sm:$0x1]
    %v127 = vperm.slane %v91, 0
    %vm129 = vcmask 130048
    %v131 = vsel %vm129, %v88, 0
    %133 = vmatpush.msra.mxu0 0.0
    %134 = vmatpush.msra.mxu0 0.0
    %135 = vmatpush.msra.mxu0 0.0
    %136 = vmatpush.msra.mxu0 0.0
    %137 = vmatpush.msra.mxu0 0.0
    %138 = vmatpush.msra.mxu0 0.0
    %139 = vmatpush.msra.mxu0 0.0
    %140 = vmatpush.msra.mxu0 0.0
    %141 = vmatpush.msra.mxu0 0.0
    %142 = vmatpush.msra.mxu0 0.0
    %143 = vmatpush.msra.mxu0 0.0
    %144 = vmatpush.msra.mxu0 0.0
    %145 = vmatpush.msra.mxu0 0.0
    %146 = vmatpush.msra.mxu0 0.0
    %147 = vmatpush.msra.mxu0 %v90
    %148 = vmatpush.msra.mxu0 %v89
    %149 = vmatmul.f32.gmra.mxu0 %v131
    %v150 = vpop.f32.mrf.mxu0
    %v151 = vadd.f32 %v127, %v150
    %152 = vdwg.mxu0
    %v153 = vmax.f32 %v151, 0.0
    %v155 = vperm.slane %v108, 0
    %157 = vmatpush.msra.mxu0 %v107
    %158 = vmatpush.msra.mxu0 %v106
    %159 = vmatpush.msra.mxu0 %v105
    %160 = vmatpush.msra.mxu0 %v104
    %161 = vmatpush.msra.mxu0 %v103
    %162 = vmatpush.msra.mxu0 %v102
    %163 = vmatpush.msra.mxu0 %v101
    %164 = vmatpush.msra.mxu0 %v100
    %165 = vmatpush.msra.mxu0 %v99
    %166 = vmatpush.msra.mxu0 %v98
    %167 = vmatpush.msra.mxu0 %v97
    %168 = vmatpush.msra.mxu0 %v96
    %169 = vmatpush.msra.mxu0 %v95
    %170 = vmatpush.msra.mxu0 %v94
    %171 = vmatpush.msra.mxu0 %v93
    %172 = vmatpush.msra.mxu0 %v92
    %173 = vmatmul.f32.gmra.mxu0 %v153
    %v174 = vpop.f32.mrf.mxu0
    %v175 = vadd.f32 %v155, %v174
    %176 = vdwg.mxu0
    %v177 = vmax.f32 %v175, 0.0
    %178 = vmatpush.msra.mxu0 %v107
    %179 = vmatpush.msra.mxu0 %v106
    %180 = vmatpush.msra.mxu0 %v105
    %181 = vmatpush.msra.mxu0 %v104
    %182 = vmatpush.msra.mxu0 %v103
    %183 = vmatpush.msra.mxu0 %v102
    %184 = vmatpush.msra.mxu0 %v101
    %185 = vmatpush.msra.mxu0 %v100
    %186 = vmatpush.msra.mxu0 %v99
    %187 = vmatpush.msra.mxu0 %v98
    %188 = vmatpush.msra.mxu0 %v97
    %189 = vmatpush.msra.mxu0 %v96
    %190 = vmatpush.msra.mxu0 %v95
    %191 = vmatpush.msra.mxu0 %v94
    %192 = vmatpush.msra.mxu0 %v93
    %193 = vmatpush.msra.mxu0 %v92
    %194 = vmatmul.f32.gmra.mxu0 %v177
    %v195 = vpop.f32.mrf.mxu0
    %v196 = vadd.f32 %v155, %v195
    %197 = vdwg.mxu0
    %v198 = vmax.f32 %v196, 0.0
    %v200 = vperm.slane %v125, 0
    %202 = vmatpush.msra.mxu0 %v124
    %203 = vmatpush.msra.mxu0 %v123
    %204 = vmatpush.msra.mxu0 %v122
    %205 = vmatpush.msra.mxu0 %v121
    %206 = vmatpush.msra.mxu0 %v120
    %207 = vmatpush.msra.mxu0 %v119
    %208 = vmatpush.msra.mxu0 %v118
    %209 = vmatpush.msra.mxu0 %v117
    %210 = vmatpush.msra.mxu0 %v116
    %211 = vmatpush.msra.mxu0 %v115
    %212 = vmatpush.msra.mxu0 %v114
    %213 = vmatpush.msra.mxu0 %v113
    %214 = vmatpush.msra.mxu0 %v112
    %215 = vmatpush.msra.mxu0 %v111
    %216 = vmatpush.msra.mxu0 %v110
    %217 = vmatpush.msra.mxu0 %v109
    %218 = vmatmul.f32.gmra.mxu0 %v198
    %v219 = vpop.f32.mrf.mxu0
    %v220 = vadd.f32 %v200, %v219
    %221 = vdwg.mxu0
    %222 = vst [vmem:[#allocation10] sm:$0xff] %v220
    // Predicated region
    $region46: #{tpu_custom_call.1} parent=1 // pred_check
      _
    $region47: #{tpu_custom_call.1} parent=1 // pred_check_branch
      %224 = sbr.rel (0) target = $region49
    $region48: #{tpu_custom_call.1} parent=1 // pred_region
      %226 = vsyncadd [#allocation4], 0
      %s228 = sshll.u32 [#allocation10], 4
      %s229 = int_to_ptr.vmem [resolvable:$true] %s228
      %s230 = sshll.u32 %s7, 4
      %s231 = int_to_ptr.hbm [resolvable:$true] %s230
      %233 = dma.vmem_to_hbm [thread:$0]  %s229, 128, %s231, [#allocation4]
    $region49: #{tpu_custom_call.1} parent=1 // pred_fallthru
      _
    // Predicated region
    $region50: #{tpu_custom_call.1} parent=1 // pred_check
      _
    $region51: #{tpu_custom_call.1} parent=1 // pred_check_branch
      %235 = sbr.rel (0) target = $region53
    $region52: #{tpu_custom_call.1} parent=1 // pred_region
      %237 = dma.done [#allocation4], 128
    $region53: #{tpu_custom_call.1} parent=1 // pred_fallthru
      _
    %238 = vsyncpa [#allocation3], 1
    %239 = vsyncpa [#allocation6], 1
    %240 = vsyncpa [#allocation9], 1
    %241 = vsyncpa [#allocation4], 1

</llo_original>
